<compile_context>
chip_gen: v7x
topology: tpu7x:2x2x1
jax: 0.10.0
libtpu: 0.0.40
codegen_flags: <defaults>
</compile_context>

<pallas_src>
import functools

import jax
import jax.numpy as jnp
from jax.experimental import pallas as pl
from jax.experimental.pallas import tpu as pltpu


_TARGET_PIXELS_PER_STEP = 16384   # ~0.35us/step overhead -> <5% at this size
_MAX_BATCH_BLOCK = 16             # cap in-kernel unroll over packed images


def _round_up(n, m):
    return ((n + m - 1) // m) * m


def _ca_kernel(x_ref, w1_ref, b1_ref, w2_ref, b2_ref, o_ref, *, mxu_dtype, bblk):
    # x_ref : (bblk, Cin, P)   w1_ref: (hidden, Cin)   b1_ref: (hidden, 1)
    # w2_ref: (Cout, hidden)   b2_ref: (Cout, 1)       o_ref : (bblk, Cout, P)
    w1 = w1_ref[...].astype(mxu_dtype)        # tiny, cast once per step
    w2 = w2_ref[...].astype(mxu_dtype)
    b1 = b1_ref[...]                          # biases stay f32
    b2 = b2_ref[...]
    for i in range(bblk):                     # static unroll over packed images
        x = x_ref[i].astype(mxu_dtype)        # (Cin, P) -> single-pass MXU
        h = jnp.dot(w1, x, preferred_element_type=jnp.float32)
        h = jnp.maximum(h + b1, 0.0)          # bias + ReLU in f32
        y = jnp.dot(w2, h.astype(mxu_dtype), preferred_element_type=jnp.float32)
        o_ref[i] = (y + b2).astype(o_ref.dtype)
    # TODO(synk): on v6e the Cout=4 projection could move to VPU/XLU to cut
    # MXU pushes ~40%; needs a bundle dump to confirm the vex slot binds first.


def ca_model_forward(x_nchw, w1, b1, w2, b2, *,
                     mxu_dtype=jnp.bfloat16,
                     p_tile_max=_TARGET_PIXELS_PER_STEP):
    """x_nchw: (B, env_d*3, H, W).  w1: (hidden, Cin), w2: (Cout, hidden)
    (PyTorch conv weight layout, squeezed).  Returns (B, env_d, H, W).

    mxu_dtype=jnp.bfloat16 gives single-pass MXU matmuls with f32 accumulation
    (fast path); pass jnp.float32 for bit-tight validation."""
    B, Cin, H, W = x_nchw.shape
    hidden, cin_w = w1.shape
    Cout = w2.shape[0]
    assert cin_w == Cin

    npix = H * W
    # Pixels live on the lane axis -> the *block* must be a multiple of 128;
    # the array itself is NOT padded (Pallas masks partial edge blocks), so no
    # extra jnp.pad / slice HBM passes.
    p_tile = min(_round_up(p_tile_max, 128), _round_up(npix, 128))
    n_ptiles = pl.cdiv(npix, p_tile)

    # Pack several small images per grid step so each step has enough work to
    # hide the fixed per-step overhead.
    bblk = max(1, min(B, _TARGET_PIXELS_PER_STEP // p_tile, _MAX_BATCH_BLOCK))
    # v7x has 2 TensorCores: prefer >=2 grid steps when there is enough work.
    if n_ptiles == 1 and bblk >= B and B > 1 and pl.cdiv(B, 2) * p_tile >= 2048:
        bblk = pl.cdiv(B, 2)
    n_btiles = pl.cdiv(B, bblk)

    x3 = x_nchw.reshape(B, Cin, npix)          # free reshape, no transpose
    b1_2d = b1.reshape(hidden, 1)
    b2_2d = b2.reshape(Cout, 1)

    kernel = functools.partial(_ca_kernel, mxu_dtype=mxu_dtype, bblk=bblk)

    out = pl.pallas_call(
        kernel,
        out_shape=jax.ShapeDtypeStruct((B, Cout, npix), x_nchw.dtype),
        grid_spec=pltpu.PrefetchScalarGridSpec(
            num_scalar_prefetch=0,
            grid=(n_btiles, n_ptiles),
            in_specs=[
                # x tile: images on the (untiled) leading axis, channels on
                # sublanes, pixels on lanes.
                pl.BlockSpec((bblk, Cin, p_tile), lambda b, p: (b, 0, p)),
                pl.BlockSpec((hidden, Cin), lambda b, p: (0, 0)),   # W1 (resident)
                pl.BlockSpec((hidden, 1), lambda b, p: (0, 0)),     # b1 (resident)
                pl.BlockSpec((Cout, hidden), lambda b, p: (0, 0)),  # W2 (resident)
                pl.BlockSpec((Cout, 1), lambda b, p: (0, 0)),       # b2 (resident)
            ],
            out_specs=pl.BlockSpec((bblk, Cout, p_tile), lambda b, p: (b, 0, p)),
        ),
        compiler_params=pltpu.CompilerParams(
            dimension_semantics=("parallel", "parallel")),
    )(x3, w1, b1_2d, w2, b2_2d)

    return out.reshape(B, Cout, H, W)


def init_params(key, env_d, hidden_d):
    """Init matching CAModel.__init__ semantics.

    conv1: PyTorch default U(-1/sqrt(fan_in), 1/sqrt(fan_in)) for weight & bias.
    conv2: zeros (weight and bias), per nn.init.zeros_.
    Weights stored as (Cout, Cin) -- the PyTorch conv weight layout squeezed.
    """
    cin = env_d * 3
    k_w1, k_b1 = jax.random.split(key)
    bound1 = 1.0 / jnp.sqrt(cin)
    w1 = jax.random.uniform(k_w1, (hidden_d, cin), jnp.float32, -bound1, bound1)
    b1 = jax.random.uniform(k_b1, (hidden_d,), jnp.float32, -bound1, bound1)
    w2 = jnp.zeros((env_d, hidden_d), jnp.float32)
    b2 = jnp.zeros((env_d,), jnp.float32)
    return w1, b1, w2, b2


def reference_forward(x_nchw, w1, b1, w2, b2):
    """Pure-JAX f32 reference for the PyTorch forward."""
    B, Cin, H, W = x_nchw.shape
    x3 = x_nchw.reshape(B, Cin, H * W)
    h = jnp.maximum(jnp.einsum("hc,bcp->bhp", w1, x3) + b1[None, :, None], 0.0)
    y = jnp.einsum("oh,bhp->bop", w2, h) + b2[None, :, None]
    return y.reshape(B, w2.shape[0], H, W)


if __name__ == "__main__":
    env_d, hidden_d = 4, 32
    B, H, W = 2, 16, 16

    key = jax.random.PRNGKey(0)
    k_x, k_p, k_w2, k_b2, k_x2 = jax.random.split(key, 5)
    x = jax.random.normal(k_x, (B, env_d * 3, H, W), jnp.float32)
    w1, b1, w2, b2 = init_params(k_p, env_d, hidden_d)

    # 1) Module-faithful parameters (conv2 zero-initialized), f32 MXU path:
    #    exact structural check.
    out = jax.block_until_ready(
        ca_model_forward(x, w1, b1, w2, b2, mxu_dtype=jnp.float32))
    ref = reference_forward(x, w1, b1, w2, b2)
    assert out.shape == (B, env_d, H, W)
    assert jnp.allclose(out, ref, atol=1e-5, rtol=1e-5)

    # 2) Non-trivial second-layer weights, default bf16 MXU operands with f32
    #    accumulation (fast path): loose tolerance vs the f32 reference.
    w2r = 0.1 * jax.random.normal(k_w2, (env_d, hidden_d), jnp.float32)
    b2r = 0.1 * jax.random.normal(k_b2, (env_d,), jnp.float32)
    out2 = jax.block_until_ready(ca_model_forward(x, w1, b1, w2r, b2r))
    ref2 = reference_forward(x, w1, b1, w2r, b2r)
    assert jnp.allclose(out2, ref2, atol=5e-2, rtol=5e-2)

    # 3) Non-multiple-of-128 pixel count, multiple pixel tiles and batch
    #    packing (masked partial edge blocks, no pad / slice), f32 path so the
    #    check stays tight.
    B3, H3, W3 = 3, 37, 29
    x_odd = jax.random.normal(k_x2, (B3, env_d * 3, H3, W3), jnp.float32)
    out3 = jax.block_until_ready(
        ca_model_forward(x_odd, w1, b1, w2r, b2r,
                         mxu_dtype=jnp.float32, p_tile_max=256))
    ref3 = reference_forward(x_odd, w1, b1, w2r, b2r)
    assert out3.shape == (B3, env_d, H3, W3)
    assert jnp.allclose(out3, ref3, atol=1e-5, rtol=1e-5)

    print("KERNEL_OK")
</pallas_src>

<mosaic_0001>
module attributes {stable_mosaic.version = 11 : i64} {
  func.func @_ca_kernel(%arg0: i32, %arg1: i32, %arg2: memref<2x12x256xf32, #tpu.memory_space<vmem>>, %arg3: memref<32x12xf32, #tpu.memory_space<vmem>>, %arg4: memref<32x1xf32, #tpu.memory_space<vmem>>, %arg5: memref<4x32xf32, #tpu.memory_space<vmem>>, %arg6: memref<4x1xf32, #tpu.memory_space<vmem>>, %arg7: memref<2x4x256xf32, #tpu.memory_space<vmem>>) attributes {dimension_semantics = [#tpu.dimension_semantics<parallel>, #tpu.dimension_semantics<parallel>], iteration_bounds = array<i64: 1, 1>, scalar_prefetch = 0 : i64, scratch_operands = 0 : i64, tpu.core_type = #tpu.core_type<tc>, window_params = [{transform_indices = @transform_0, window_bounds = array<i64: 2, 12, 256>}, {pipeline_mode = #tpu.pipeline_mode<synchronous>, transform_indices = @transform_1, window_bounds = array<i64: 32, 12>}, {pipeline_mode = #tpu.pipeline_mode<synchronous>, transform_indices = @transform_2, window_bounds = array<i64: 32, 1>}, {pipeline_mode = #tpu.pipeline_mode<synchronous>, transform_indices = @transform_3, window_bounds = array<i64: 4, 32>}, {pipeline_mode = #tpu.pipeline_mode<synchronous>, transform_indices = @transform_4, window_bounds = array<i64: 4, 1>}, {transform_indices = @transform_5, window_bounds = array<i64: 2, 4, 256>}]} {
    %c0 = arith.constant 0 : index
    %c0_0 = arith.constant 0 : index
    %0 = vector.load %arg3[%c0, %c0_0] : memref<32x12xf32, #tpu.memory_space<vmem>>, vector<32x12xf32>
    %c0_1 = arith.constant 0 : index
    %c0_2 = arith.constant 0 : index
    %1 = vector.load %arg5[%c0_1, %c0_2] : memref<4x32xf32, #tpu.memory_space<vmem>>, vector<4x32xf32>
    %c0_3 = arith.constant 0 : index
    %c0_4 = arith.constant 0 : index
    %2 = vector.load %arg4[%c0_3, %c0_4] : memref<32x1xf32, #tpu.memory_space<vmem>>, vector<32x1xf32>
    %c0_5 = arith.constant 0 : index
    %c0_6 = arith.constant 0 : index
    %3 = vector.load %arg6[%c0_5, %c0_6] : memref<4x1xf32, #tpu.memory_space<vmem>>, vector<4x1xf32>
    %c0_7 = arith.constant 0 : index
    %c0_8 = arith.constant 0 : index
    %c0_9 = arith.constant 0 : index
    %4 = vector.load %arg2[%c0_7, %c0_8, %c0_9] : memref<2x12x256xf32, #tpu.memory_space<vmem>>, vector<1x12x256xf32>
    %5 = vector.shape_cast %4 : vector<1x12x256xf32> to vector<12x256xf32>
    %cst = arith.constant dense<0.000000e+00> : vector<32x256xf32>
    %6 = tpu.matmul %0, %5, %cst {dimension_numbers = #tpu.dot_dimension_numbers<[1], [0], [0], [1], [0, 0, 1, 1], [], []>} : vector<32x12xf32>, vector<12x256xf32>, vector<32x256xf32> -> vector<32x256xf32>
    %7 = vector.broadcast %2 : vector<32x1xf32> to vector<32x256xf32>
    %8 = arith.addf %6, %7 : vector<32x256xf32>
    %cst_10 = arith.constant 0.000000e+00 : f32
    %9 = vector.broadcast %cst_10 : f32 to vector<32x256xf32>
    %10 = arith.maximumf %8, %9 : vector<32x256xf32>
    %cst_11 = arith.constant dense<0.000000e+00> : vector<4x256xf32>
    %11 = tpu.matmul %1, %10, %cst_11 {dimension_numbers = #tpu.dot_dimension_numbers<[1], [0], [0], [1], [0, 0, 1, 1], [], []>} : vector<4x32xf32>, vector<32x256xf32>, vector<4x256xf32> -> vector<4x256xf32>
    %12 = vector.broadcast %3 : vector<4x1xf32> to vector<4x256xf32>
    %13 = arith.addf %11, %12 : vector<4x256xf32>
    %c0_12 = arith.constant 0 : index
    %c0_13 = arith.constant 0 : index
    %c0_14 = arith.constant 0 : index
    %14 = vector.load %arg7[%c0_12, %c0_13, %c0_14] : memref<2x4x256xf32, #tpu.memory_space<vmem>>, vector<1x4x256xf32>
    %15 = vector.shape_cast %14 : vector<1x4x256xf32> to vector<4x256xf32>
    %16 = vector.shape_cast %13 : vector<4x256xf32> to vector<1x4x256xf32>
    tpu.vector_store %arg7[%c0_12, %c0_13, %c0_14], %16 {strides = array<i32>} : memref<2x4x256xf32, #tpu.memory_space<vmem>>, vector<1x4x256xf32>,
    %c1 = arith.constant 1 : index
    %c0_15 = arith.constant 0 : index
    %c0_16 = arith.constant 0 : index
    %17 = vector.load %arg2[%c1, %c0_15, %c0_16] : memref<2x12x256xf32, #tpu.memory_space<vmem>>, vector<1x12x256xf32>
    %18 = vector.shape_cast %17 : vector<1x12x256xf32> to vector<12x256xf32>
    %cst_17 = arith.constant dense<0.000000e+00> : vector<32x256xf32>
    %19 = tpu.matmul %0, %18, %cst_17 {dimension_numbers = #tpu.dot_dimension_numbers<[1], [0], [0], [1], [0, 0, 1, 1], [], []>} : vector<32x12xf32>, vector<12x256xf32>, vector<32x256xf32> -> vector<32x256xf32>
    %20 = vector.broadcast %2 : vector<32x1xf32> to vector<32x256xf32>
    %21 = arith.addf %19, %20 : vector<32x256xf32>
    %cst_18 = arith.constant 0.000000e+00 : f32
    %22 = vector.broadcast %cst_18 : f32 to vector<32x256xf32>
    %23 = arith.maximumf %21, %22 : vector<32x256xf32>
    %cst_19 = arith.constant dense<0.000000e+00> : vector<4x256xf32>
    %24 = tpu.matmul %1, %23, %cst_19 {dimension_numbers = #tpu.dot_dimension_numbers<[1], [0], [0], [1], [0, 0, 1, 1], [], []>} : vector<4x32xf32>, vector<32x256xf32>, vector<4x256xf32> -> vector<4x256xf32>
    %25 = vector.broadcast %3 : vector<4x1xf32> to vector<4x256xf32>
    %26 = arith.addf %24, %25 : vector<4x256xf32>
    %c1_20 = arith.constant 1 : index
    %c0_21 = arith.constant 0 : index
    %c0_22 = arith.constant 0 : index
    %27 = vector.load %arg7[%c1_20, %c0_21, %c0_22] : memref<2x4x256xf32, #tpu.memory_space<vmem>>, vector<1x4x256xf32>
    %28 = vector.shape_cast %27 : vector<1x4x256xf32> to vector<4x256xf32>
    %29 = vector.shape_cast %26 : vector<4x256xf32> to vector<1x4x256xf32>
    tpu.vector_store %arg7[%c1_20, %c0_21, %c0_22], %29 {strides = array<i32>} : memref<2x4x256xf32, #tpu.memory_space<vmem>>, vector<1x4x256xf32>,
    return
  }
  func.func @transform_0(%arg0: i32, %arg1: i32) -> (i32, i32, i32) {
    %c0_i32 = arith.constant 0 : i32
    %c0_i32_0 = arith.constant 0 : i32
    return %arg0, %c0_i32, %arg1 : i32, i32, i32
  }
  func.func @transform_1(%arg0: i32, %arg1: i32) -> (i32, i32) {
    %c0_i32 = arith.constant 0 : i32
    %c0_i32_0 = arith.constant 0 : i32
    %c0_i32_1 = arith.constant 0 : i32
    return %c0_i32, %c0_i32_0 : i32, i32
  }
  func.func @transform_2(%arg0: i32, %arg1: i32) -> (i32, i32) {
    %c0_i32 = arith.constant 0 : i32
    %c0_i32_0 = arith.constant 0 : i32
    %c0_i32_1 = arith.constant 0 : i32
    return %c0_i32, %c0_i32_0 : i32, i32
  }
  func.func @transform_3(%arg0: i32, %arg1: i32) -> (i32, i32) {
    %c0_i32 = arith.constant 0 : i32
    %c0_i32_0 = arith.constant 0 : i32
    %c0_i32_1 = arith.constant 0 : i32
    return %c0_i32, %c0_i32_0 : i32, i32
  }
  func.func @transform_4(%arg0: i32, %arg1: i32) -> (i32, i32) {
    %c0_i32 = arith.constant 0 : i32
    %c0_i32_0 = arith.constant 0 : i32
    %c0_i32_1 = arith.constant 0 : i32
    return %c0_i32, %c0_i32_0 : i32, i32
  }
  func.func @transform_5(%arg0: i32, %arg1: i32) -> (i32, i32, i32) {
    %c0_i32 = arith.constant 0 : i32
    %c0_i32_0 = arith.constant 0 : i32
    return %arg0, %c0_i32, %arg1 : i32, i32, i32
  }
}

</mosaic_0001>

<llo_original>
// kernel: tpu_custom_call.1
$region0: #{tpu_custom_call.1}
  #allocation0 [shape = 'u32[]', space=smem, size = 0x4, offset = 0x4, fixed_abs, tag = 'smem constant byte address 0x4 - core index']
  #allocation1 [shape = 'u32[144,128]{1,0:T(1,128)}', space=vmem, size = 0x12000, scoped, tag = 'internal scratch']
  %s0 = inlined_call_operand.vmem [shape: f32[2,12,256], index: 0, kind: input, shape index: {}]
  %s1 = inlined_call_operand.vmem [shape: f32[32,12], index: 1, kind: input, shape index: {}]
  %s2 = inlined_call_operand.vmem [shape: f32[32,1], index: 2, kind: input, shape index: {}]
  %s3 = inlined_call_operand.vmem [shape: f32[4,32], index: 3, kind: input, shape index: {}]
  %s4 = inlined_call_operand.vmem [shape: f32[4,1], index: 4, kind: input, shape index: {}]
  %s5 = inlined_call_operand.hbm [shape: f32[2,4,256], index: 5, kind: output, shape index: {}]
  %s6 = sld [smem:[#allocation0]]
  $region30: #{tpu_custom_call.1} parent=0
    _
  %s8 = ssub.s32 1, %s6
  %s9 = scalar_select 0, %s8, %s6
  $region1: #{tpu_custom_call.1} parent=0
    #allocation2 [shape = 'u8[8192]{0}', space=vmem, size = 0x2000, scoped, tag = 'output window, operand 0, single buffered']
    #allocation3 [shape = 's32[1]{0}', space=sflag, size = 0x4, scoped, tag = 'scoped memory for tpu_custom_call.1']
    %10 = vsyncpa [#allocation3], 0
    // Predicated region
    $region2: #{tpu_custom_call.1} parent=1 // pred_check
      _
    $region3: #{tpu_custom_call.1} parent=1 // pred_check_branch
      %12 = sbr.rel (0) target = $region5
    $region4: #{tpu_custom_call.1} parent=1 // pred_region
      _
    $region5: #{tpu_custom_call.1} parent=1 // pred_fallthru
      _
    // Predicated region
    $region6: #{tpu_custom_call.1} parent=1 // pred_check
      _
    $region7: #{tpu_custom_call.1} parent=1 // pred_check_branch
      %14 = sbr.rel (0) target = $region9
    $region8: #{tpu_custom_call.1} parent=1 // pred_region
      _
    $region9: #{tpu_custom_call.1} parent=1 // pred_fallthru
      _
    // Predicated region
    $region10: #{tpu_custom_call.1} parent=1 // pred_check
      _
    $region11: #{tpu_custom_call.1} parent=1 // pred_check_branch
      %16 = sbr.rel (0) target = $region13
    $region12: #{tpu_custom_call.1} parent=1 // pred_region
      _
    $region13: #{tpu_custom_call.1} parent=1 // pred_fallthru
      _
    // Predicated region
    $region14: #{tpu_custom_call.1} parent=1 // pred_check
      _
    $region15: #{tpu_custom_call.1} parent=1 // pred_check_branch
      %18 = sbr.rel (0) target = $region17
    $region16: #{tpu_custom_call.1} parent=1 // pred_region
      _
    $region17: #{tpu_custom_call.1} parent=1 // pred_fallthru
      _
    // Predicated region
    $region18: #{tpu_custom_call.1} parent=1 // pred_check
      _
    $region19: #{tpu_custom_call.1} parent=1 // pred_check_branch
      %20 = sbr.rel (0) target = $region21
    $region20: #{tpu_custom_call.1} parent=1 // pred_region
      _
    $region21: #{tpu_custom_call.1} parent=1 // pred_fallthru
      _
    %v21 = vld [vmem:[%s1] sm:$0xff]
    %v22 = vld [vmem:[%s1 + $0x8] sm:$0xff]
    %v23 = vld [vmem:[%s1 + $0x10] sm:$0xff]
    %v24 = vld [vmem:[%s1 + $0x18] sm:$0xff]
    %v25 = vld [vmem:[%s3] sm:$0xf]
    %v26 = vld [vmem:[%s2] sm:$0xff]
    %v27 = vld [vmem:[%s2 + $0x8] sm:$0xff]
    %v28 = vld [vmem:[%s2 + $0x10] sm:$0xff]
    %v29 = vld [vmem:[%s2 + $0x18] sm:$0xff]
    %v30 = vld [vmem:[%s4] sm:$0xf]
    %v31 = vld [vmem:[%s0] sm:$0xff]
    %v32 = vld [vmem:[%s0 + $0x8] sm:$0xff]
    %v33 = vld [vmem:[%s0 + $0x10] sm:$0xf]
    %v34 = vld [vmem:[%s0 + $0x18] sm:$0xf]
    %36 = vset.pattern.permute.xlu0 0
    %37 = vperm.xlu0 %36, %v26
    %v38 = vpop.permute.xlu0 %37
    %41 = vset.pattern.permute.xlu0 0
    %42 = vperm.xlu0 %41, %v27
    %v43 = vpop.permute.xlu0 %42
    %46 = vset.pattern.permute.xlu0 0
    %47 = vperm.xlu0 %46, %v28
    %v48 = vpop.permute.xlu0 %47
    %51 = vset.pattern.permute.xlu0 0
    %52 = vperm.xlu0 %51, %v29
    %v53 = vpop.permute.xlu0 %52
    %vm55 = vcmask 97280
    %v57 = vsel %vm55, %v21, 0
    %v60 = vsel %vm55, %v22, 0
    %v63 = vsel %vm55, %v23, 0
    %v66 = vsel %vm55, %v24, 0
    %vm68 = vcmask 1043456
    %v70 = vsel %vm68, %v33, 0
    %v73 = vsel %vm68, %v34, 0
    %75 = vmatprep.subr.mxu0 %v32
    %76 = vmatpush1.msra.mxu0 %v31
    %77 = vmatprep.subr.mxu0 %v73
    %78 = vmatpush1.msra.mxu0 %v70
    %79 = vmatprep.subr.mxu0 0.0
    %80 = vmatpush1.msra.mxu0 0.0
    %81 = vmatprep.subr.mxu0 0.0
    %82 = vmatpush1.msra.mxu0 0.0
    %83 = vmatprep.subr.mxu0 0.0
    %84 = vmatpush1.msra.mxu0 0.0
    %85 = vmatprep.subr.mxu0 0.0
    %86 = vmatpush1.msra.mxu0 0.0
    %87 = vmatprep.subr.mxu0 0.0
    %88 = vmatpush1.msra.mxu0 0.0
    %89 = vmatprep.subr.mxu0 0.0
    %90 = vmatpush1.msra.mxu0 0.0
    %91 = vmatprep.subr.mxu0 0.0
    %92 = vmatpush1.msra.mxu0 0.0
    %93 = vmatprep.subr.mxu0 0.0
    %94 = vmatpush1.msra.mxu0 0.0
    %95 = vmatprep.subr.mxu0 0.0
    %96 = vmatpush1.msra.mxu0 0.0
    %97 = vmatprep.subr.mxu0 0.0
    %98 = vmatpush1.msra.mxu0 0.0
    %99 = vmatprep.subr.mxu0 0.0
    %100 = vmatpush1.msra.mxu0 0.0
    %101 = vmatprep.subr.mxu0 0.0
    %102 = vmatpush1.msra.mxu0 0.0
    %103 = vmatprep.subr.mxu0 0.0
    %104 = vmatpush1.msra.mxu0 0.0
    %105 = vmatprep.subr.mxu0 0.0
    %106 = vmatpush1.msra.mxu0 0.0
    %107 = vmatprep.subr.mxu0 0.0
    %108 = vmatpush1.msra.mxu0 0.0
    %109 = vmatprep.subr.mxu0 0.0
    %110 = vmatpush1.msra.mxu0 0.0
    %111 = vmatprep.subr.mxu0 0.0
    %112 = vmatpush1.msra.mxu0 0.0
    %113 = vmatprep.subr.mxu0 0.0
    %114 = vmatpush1.msra.mxu0 0.0
    %115 = vmatprep.subr.mxu0 0.0
    %116 = vmatpush1.msra.mxu0 0.0
    %117 = vmatprep.subr.mxu0 0.0
    %118 = vmatpush1.msra.mxu0 0.0
    %119 = vmatprep.subr.mxu0 0.0
    %120 = vmatpush1.msra.mxu0 0.0
    %121 = vmatprep.subr.mxu0 0.0
    %122 = vmatpush1.msra.mxu0 0.0
    %123 = vmatprep.subr.mxu0 0.0
    %124 = vmatpush1.msra.mxu0 0.0
    %125 = vmatprep.subr.mxu0 0.0
    %126 = vmatpush1.msra.mxu0 0.0
    %127 = vmatprep.subr.mxu0 0.0
    %128 = vmatpush1.msra.mxu0 0.0
    %129 = vmatprep.subr.mxu0 0.0
    %130 = vmatpush1.msra.mxu0 0.0
    %131 = vmatprep.subr.mxu0 0.0
    %132 = vmatpush1.msra.mxu0 0.0
    %133 = vmatprep.subr.mxu0 0.0
    %134 = vmatpush1.msra.mxu0 0.0
    %135 = vmatprep.subr.mxu0 0.0
    %136 = vmatpush1.msra.mxu0 0.0
    %137 = vmatprep.subr.mxu0 0.0
    %138 = vmatpush1.msra.mxu0 0.0
    %139 = vmatprep.mubr.f32.mxu0 0.0
    %140 = vmatmul.mubr.f32.gmra.mrb[0].mxu0 %v57
    %v141 = vpop.f32.mrb[0].mxu0
    %v142 = vadd.f32 %v38, %v141
    %v143 = vpop.f32.mrb[0].mxu0
    %v144 = vadd.f32 %v38, %v143
    %145 = vmatprep.mubr.f32.mxu0 0.0
    %146 = vmatmul.mubr.f32.gmra.mrb[0].mxu0 %v60
    %v147 = vpop.f32.mrb[0].mxu0
    %v148 = vadd.f32 %v43, %v147
    %v149 = vpop.f32.mrb[0].mxu0
    %v150 = vadd.f32 %v43, %v149
    %151 = vmatprep.mubr.f32.mxu0 0.0
    %152 = vmatmul.mubr.f32.gmra.mrb[0].mxu0 %v63
    %v153 = vpop.f32.mrb[0].mxu0
    %v154 = vadd.f32 %v48, %v153
    %v155 = vpop.f32.mrb[0].mxu0
    %v156 = vadd.f32 %v48, %v155
    %157 = vmatprep.mubr.f32.mxu0 0.0
    %158 = vmatmul.mubr.f32.gmra.mrb[0].mxu0 %v66
    %v159 = vpop.f32.mrb[0].mxu0
    %v160 = vadd.f32 %v53, %v159
    %v161 = vpop.f32.mrb[0].mxu0
    %v162 = vadd.f32 %v53, %v161
    %163 = vdwg.mxu0
    %v164 = vmax.f32 %v142, 0.0
    %v165 = vmax.f32 %v144, 0.0
    %v166 = vmax.f32 %v148, 0.0
    %v167 = vmax.f32 %v150, 0.0
    %v168 = vmax.f32 %v154, 0.0
    %v169 = vmax.f32 %v156, 0.0
    %v170 = vmax.f32 %v160, 0.0
    %v171 = vmax.f32 %v162, 0.0
    %173 = vset.pattern.permute.xlu0 0
    %174 = vperm.xlu0 %173, %v30
    %v175 = vpop.permute.xlu0 %174
    %vm177 = vcmask 261120
    %v179 = vsel %vm177, %v25, 0
    %181 = vmatprep.subr.mxu0 %v165
    %182 = vmatpush1.msra.mxu0 %v164
    %183 = vmatprep.subr.mxu0 %v167
    %184 = vmatpush1.msra.mxu0 %v166
    %185 = vmatprep.subr.mxu0 %v169
    %186 = vmatpush1.msra.mxu0 %v168
    %187 = vmatprep.subr.mxu0 %v171
    %188 = vmatpush1.msra.mxu0 %v170
    %189 = vmatprep.subr.mxu0 0.0
    %190 = vmatpush1.msra.mxu0 0.0
    %191 = vmatprep.subr.mxu0 0.0
    %192 = vmatpush1.msra.mxu0 0.0
    %193 = vmatprep.subr.mxu0 0.0
    %194 = vmatpush1.msra.mxu0 0.0
    %195 = vmatprep.subr.mxu0 0.0
    %196 = vmatpush1.msra.mxu0 0.0
    %197 = vmatprep.subr.mxu0 0.0
    %198 = vmatpush1.msra.mxu0 0.0
    %199 = vmatprep.subr.mxu0 0.0
    %200 = vmatpush1.msra.mxu0 0.0
    %201 = vmatprep.subr.mxu0 0.0
    %202 = vmatpush1.msra.mxu0 0.0
    %203 = vmatprep.subr.mxu0 0.0
    %204 = vmatpush1.msra.mxu0 0.0
    %205 = vmatprep.subr.mxu0 0.0
    %206 = vmatpush1.msra.mxu0 0.0
    %207 = vmatprep.subr.mxu0 0.0
    %208 = vmatpush1.msra.mxu0 0.0
    %209 = vmatprep.subr.mxu0 0.0
    %210 = vmatpush1.msra.mxu0 0.0
    %211 = vmatprep.subr.mxu0 0.0
    %212 = vmatpush1.msra.mxu0 0.0
    %213 = vmatprep.subr.mxu0 0.0
    %214 = vmatpush1.msra.mxu0 0.0
    %215 = vmatprep.subr.mxu0 0.0
    %216 = vmatpush1.msra.mxu0 0.0
    %217 = vmatprep.subr.mxu0 0.0
    %218 = vmatpush1.msra.mxu0 0.0
    %219 = vmatprep.subr.mxu0 0.0
    %220 = vmatpush1.msra.mxu0 0.0
    %221 = vmatprep.subr.mxu0 0.0
    %222 = vmatpush1.msra.mxu0 0.0
    %223 = vmatprep.subr.mxu0 0.0
    %224 = vmatpush1.msra.mxu0 0.0
    %225 = vmatprep.subr.mxu0 0.0
    %226 = vmatpush1.msra.mxu0 0.0
    %227 = vmatprep.subr.mxu0 0.0
    %228 = vmatpush1.msra.mxu0 0.0
    %229 = vmatprep.subr.mxu0 0.0
    %230 = vmatpush1.msra.mxu0 0.0
    %231 = vmatprep.subr.mxu0 0.0
    %232 = vmatpush1.msra.mxu0 0.0
    %233 = vmatprep.subr.mxu0 0.0
    %234 = vmatpush1.msra.mxu0 0.0
    %235 = vmatprep.subr.mxu0 0.0
    %236 = vmatpush1.msra.mxu0 0.0
    %237 = vmatprep.subr.mxu0 0.0
    %238 = vmatpush1.msra.mxu0 0.0
    %239 = vmatprep.subr.mxu0 0.0
    %240 = vmatpush1.msra.mxu0 0.0
    %241 = vmatprep.subr.mxu0 0.0
    %242 = vmatpush1.msra.mxu0 0.0
    %243 = vmatprep.subr.mxu0 0.0
    %244 = vmatpush1.msra.mxu0 0.0
    %245 = vmatprep.mubr.f32.mxu0 0.0
    %246 = vmatmul.mubr.f32.gmra.mrb[0].mxu0 %v179
    %v247 = vpop.f32.mrb[0].mxu0
    %v248 = vadd.f32 %v175, %v247
    %v249 = vpop.f32.mrb[0].mxu0
    %v250 = vadd.f32 %v175, %v249
    %251 = vdwg.mxu0
    %v254 = vcombine.low %v248, %v250
    %256 = vst [vmem:[#allocation2] sm:$0xff] %v254
    %s257 = scalar_lea.vmem %s0, 32
    %v258 = vld [vmem:[%s257] sm:$0xff]
    %v259 = vld [vmem:[%s257 + $0x8] sm:$0xff]
    %v260 = vld [vmem:[%s257 + $0x10] sm:$0xf]
    %v261 = vld [vmem:[%s257 + $0x18] sm:$0xf]
    %v263 = vsel %vm68, %v260, 0
    %v266 = vsel %vm68, %v261, 0
    %268 = vmatprep.subr.mxu0 %v259
    %269 = vmatpush1.msra.mxu0 %v258
    %270 = vmatprep.subr.mxu0 %v266
    %271 = vmatpush1.msra.mxu0 %v263
    %272 = vmatprep.subr.mxu0 0.0
    %273 = vmatpush1.msra.mxu0 0.0
    %274 = vmatprep.subr.mxu0 0.0
    %275 = vmatpush1.msra.mxu0 0.0
    %276 = vmatprep.subr.mxu0 0.0
    %277 = vmatpush1.msra.mxu0 0.0
    %278 = vmatprep.subr.mxu0 0.0
    %279 = vmatpush1.msra.mxu0 0.0
    %280 = vmatprep.subr.mxu0 0.0
    %281 = vmatpush1.msra.mxu0 0.0
    %282 = vmatprep.subr.mxu0 0.0
    %283 = vmatpush1.msra.mxu0 0.0
    %284 = vmatprep.subr.mxu0 0.0
    %285 = vmatpush1.msra.mxu0 0.0
    %286 = vmatprep.subr.mxu0 0.0
    %287 = vmatpush1.msra.mxu0 0.0
    %288 = vmatprep.subr.mxu0 0.0
    %289 = vmatpush1.msra.mxu0 0.0
    %290 = vmatprep.subr.mxu0 0.0
    %291 = vmatpush1.msra.mxu0 0.0
    %292 = vmatprep.subr.mxu0 0.0
    %293 = vmatpush1.msra.mxu0 0.0
    %294 = vmatprep.subr.mxu0 0.0
    %295 = vmatpush1.msra.mxu0 0.0
    %296 = vmatprep.subr.mxu0 0.0
    %297 = vmatpush1.msra.mxu0 0.0
    %298 = vmatprep.subr.mxu0 0.0
    %299 = vmatpush1.msra.mxu0 0.0
    %300 = vmatprep.subr.mxu0 0.0
    %301 = vmatpush1.msra.mxu0 0.0
    %302 = vmatprep.subr.mxu0 0.0
    %303 = vmatpush1.msra.mxu0 0.0
    %304 = vmatprep.subr.mxu0 0.0
    %305 = vmatpush1.msra.mxu0 0.0
    %306 = vmatprep.subr.mxu0 0.0
    %307 = vmatpush1.msra.mxu0 0.0
    %308 = vmatprep.subr.mxu0 0.0
    %309 = vmatpush1.msra.mxu0 0.0
    %310 = vmatprep.subr.mxu0 0.0
    %311 = vmatpush1.msra.mxu0 0.0
    %312 = vmatprep.subr.mxu0 0.0
    %313 = vmatpush1.msra.mxu0 0.0
    %314 = vmatprep.subr.mxu0 0.0
    %315 = vmatpush1.msra.mxu0 0.0
    %316 = vmatprep.subr.mxu0 0.0
    %317 = vmatpush1.msra.mxu0 0.0
    %318 = vmatprep.subr.mxu0 0.0
    %319 = vmatpush1.msra.mxu0 0.0
    %320 = vmatprep.subr.mxu0 0.0
    %321 = vmatpush1.msra.mxu0 0.0
    %322 = vmatprep.subr.mxu0 0.0
    %323 = vmatpush1.msra.mxu0 0.0
    %324 = vmatprep.subr.mxu0 0.0
    %325 = vmatpush1.msra.mxu0 0.0
    %326 = vmatprep.subr.mxu0 0.0
    %327 = vmatpush1.msra.mxu0 0.0
    %328 = vmatprep.subr.mxu0 0.0
    %329 = vmatpush1.msra.mxu0 0.0
    %330 = vmatprep.subr.mxu0 0.0
    %331 = vmatpush1.msra.mxu0 0.0
    %332 = vmatprep.mubr.f32.mxu0 0.0
    %333 = vmatmul.mubr.f32.gmra.mrb[0].mxu0 %v57
    %v334 = vpop.f32.mrb[0].mxu0
    %v335 = vadd.f32 %v38, %v334
    %v336 = vpop.f32.mrb[0].mxu0
    %v337 = vadd.f32 %v38, %v336
    %338 = vmatprep.mubr.f32.mxu0 0.0
    %339 = vmatmul.mubr.f32.gmra.mrb[0].mxu0 %v60
    %v340 = vpop.f32.mrb[0].mxu0
    %v341 = vadd.f32 %v43, %v340
    %v342 = vpop.f32.mrb[0].mxu0
    %v343 = vadd.f32 %v43, %v342
    %344 = vmatprep.mubr.f32.mxu0 0.0
    %345 = vmatmul.mubr.f32.gmra.mrb[0].mxu0 %v63
    %v346 = vpop.f32.mrb[0].mxu0
    %v347 = vadd.f32 %v48, %v346
    %v348 = vpop.f32.mrb[0].mxu0
    %v349 = vadd.f32 %v48, %v348
    %350 = vmatprep.mubr.f32.mxu0 0.0
    %351 = vmatmul.mubr.f32.gmra.mrb[0].mxu0 %v66
    %v352 = vpop.f32.mrb[0].mxu0
    %v353 = vadd.f32 %v53, %v352
    %v354 = vpop.f32.mrb[0].mxu0
    %v355 = vadd.f32 %v53, %v354
    %356 = vdwg.mxu0
    %v357 = vmax.f32 %v335, 0.0
    %v358 = vmax.f32 %v337, 0.0
    %v359 = vmax.f32 %v341, 0.0
    %v360 = vmax.f32 %v343, 0.0
    %v361 = vmax.f32 %v347, 0.0
    %v362 = vmax.f32 %v349, 0.0
    %v363 = vmax.f32 %v353, 0.0
    %v364 = vmax.f32 %v355, 0.0
    %365 = vmatprep.subr.mxu0 %v358
    %366 = vmatpush1.msra.mxu0 %v357
    %367 = vmatprep.subr.mxu0 %v360
    %368 = vmatpush1.msra.mxu0 %v359
    %369 = vmatprep.subr.mxu0 %v362
    %370 = vmatpush1.msra.mxu0 %v361
    %371 = vmatprep.subr.mxu0 %v364
    %372 = vmatpush1.msra.mxu0 %v363
    %373 = vmatprep.subr.mxu0 0.0
    %374 = vmatpush1.msra.mxu0 0.0
    %375 = vmatprep.subr.mxu0 0.0
    %376 = vmatpush1.msra.mxu0 0.0
    %377 = vmatprep.subr.mxu0 0.0
    %378 = vmatpush1.msra.mxu0 0.0
    %379 = vmatprep.subr.mxu0 0.0
    %380 = vmatpush1.msra.mxu0 0.0
    %381 = vmatprep.subr.mxu0 0.0
    %382 = vmatpush1.msra.mxu0 0.0
    %383 = vmatprep.subr.mxu0 0.0
    %384 = vmatpush1.msra.mxu0 0.0
    %385 = vmatprep.subr.mxu0 0.0
    %386 = vmatpush1.msra.mxu0 0.0
    %387 = vmatprep.subr.mxu0 0.0
    %388 = vmatpush1.msra.mxu0 0.0
    %389 = vmatprep.subr.mxu0 0.0
    %390 = vmatpush1.msra.mxu0 0.0
    %391 = vmatprep.subr.mxu0 0.0
    %392 = vmatpush1.msra.mxu0 0.0
    %393 = vmatprep.subr.mxu0 0.0
    %394 = vmatpush1.msra.mxu0 0.0
    %395 = vmatprep.subr.mxu0 0.0
    %396 = vmatpush1.msra.mxu0 0.0
    %397 = vmatprep.subr.mxu0 0.0
    %398 = vmatpush1.msra.mxu0 0.0
    %399 = vmatprep.subr.mxu0 0.0
    %400 = vmatpush1.msra.mxu0 0.0
    %401 = vmatprep.subr.mxu0 0.0
    %402 = vmatpush1.msra.mxu0 0.0
    %403 = vmatprep.subr.mxu0 0.0
    %404 = vmatpush1.msra.mxu0 0.0
    %405 = vmatprep.subr.mxu0 0.0
    %406 = vmatpush1.msra.mxu0 0.0
    %407 = vmatprep.subr.mxu0 0.0
    %408 = vmatpush1.msra.mxu0 0.0
    %409 = vmatprep.subr.mxu0 0.0
    %410 = vmatpush1.msra.mxu0 0.0
    %411 = vmatprep.subr.mxu0 0.0
    %412 = vmatpush1.msra.mxu0 0.0
    %413 = vmatprep.subr.mxu0 0.0
    %414 = vmatpush1.msra.mxu0 0.0
    %415 = vmatprep.subr.mxu0 0.0
    %416 = vmatpush1.msra.mxu0 0.0
    %417 = vmatprep.subr.mxu0 0.0
    %418 = vmatpush1.msra.mxu0 0.0
    %419 = vmatprep.subr.mxu0 0.0
    %420 = vmatpush1.msra.mxu0 0.0
    %421 = vmatprep.subr.mxu0 0.0
    %422 = vmatpush1.msra.mxu0 0.0
    %423 = vmatprep.subr.mxu0 0.0
    %424 = vmatpush1.msra.mxu0 0.0
    %425 = vmatprep.subr.mxu0 0.0
    %426 = vmatpush1.msra.mxu0 0.0
    %427 = vmatprep.subr.mxu0 0.0
    %428 = vmatpush1.msra.mxu0 0.0
    %429 = vmatprep.mubr.f32.mxu0 0.0
    %430 = vmatmul.mubr.f32.gmra.mrb[0].mxu0 %v179
    %v431 = vpop.f32.mrb[0].mxu0
    %v432 = vadd.f32 %v175, %v431
    %v433 = vpop.f32.mrb[0].mxu0
    %v434 = vadd.f32 %v175, %v433
    %435 = vdwg.mxu0
    %v438 = vcombine.low %v432, %v434
    %s440 = scalar_lea.vmem [#allocation2], 8
    %441 = vst [vmem:[%s440] sm:$0xff] %v438
    // Predicated region
    $region22: #{tpu_custom_call.1} parent=1 // pred_check
      _
    $region23: #{tpu_custom_call.1} parent=1 // pred_check_branch
      %443 = sbr.rel (0) target = $region25
    $region24: #{tpu_custom_call.1} parent=1 // pred_region
      %s445 = ssub.s32 256, 256
      %446 = vsyncadd [#allocation3], %s445
      %s447 = sshll.u32 [#allocation2], 4
      %s448 = int_to_ptr.vmem [resolvable:$true] %s447
      %453 = dma.vmem_to_hbm [thread:$0]  %s448, 256, %s5, [#allocation3], 128, 128, 8
    $region25: #{tpu_custom_call.1} parent=1 // pred_fallthru
      _
    // Predicated region
    $region26: #{tpu_custom_call.1} parent=1 // pred_check
      _
    $region27: #{tpu_custom_call.1} parent=1 // pred_check_branch
      %455 = sbr.rel (0) target = $region29
    $region28: #{tpu_custom_call.1} parent=1 // pred_region
      %456 = dma.done [#allocation3], 256
    $region29: #{tpu_custom_call.1} parent=1 // pred_fallthru
      _
    %457 = vsyncpa [#allocation3], 1

</llo_original>
